<compile_context>
chip_gen: v7x
topology: tpu7x:2x2x1
jax: 0.10.0
libtpu: 0.0.40
codegen_flags: <defaults>
</compile_context>

<pallas_src>
import jax
import jax.numpy as jnp
from jax.experimental import pallas as pl
from jax.experimental.pallas import tpu as pltpu


def _biased_prelu_kernel(x_ref, b_ref, a_ref, o_ref):
    # x_ref: (R_BLK, L_BLK)   b_ref/a_ref: (R_BLK, 1) float32
    x = x_ref[...].astype(jnp.float32)
    b = b_ref[...]                       # broadcast over lanes
    a = a_ref[...]
    z = x - b
    o_ref[...] = jnp.where(z >= 0, z, a * z).astype(o_ref.dtype)


def _vmem_budget_and_tile_target():
    """Pick (vmem_limit_bytes, per-tile target bytes) per TPU generation."""
    vmem_bytes = None
    try:
        info = pltpu.get_tpu_info()
        vmem_bytes = getattr(info, "vmem_capacity_bytes", None)
    except Exception:
        vmem_bytes = None
    if vmem_bytes is not None and vmem_bytes > (96 << 20):
        # v5e / v6e: 128 MiB physical VMEM -> 8 MiB tiles under a 64 MiB limit.
        return 64 << 20, 8 << 20
    # v7x (64 MiB/TC) or unknown: 6 MiB tiles under a 48 MiB limit
    # (footprint ~4x tile = 24 MiB). Safe on every generation.
    return 48 << 20, 6 << 20


def _choose_tiles(rows, hw, itemsize, target_bytes):
    """(8,128)-aligned, lane-dense tiles of ~target_bytes; ragged tails masked."""
    # Lane (last) dim: large multiple of 128 (unmasked vst for all but the
    # final block); full-extent only when hw < 128 (always legal).
    if hw % 128 == 0:
        l_blk = min(hw, 4096)
    elif hw > 128:
        l_blk = min((hw // 128) * 128, 4096)
    else:
        l_blk = hw
    # Row (sublane) dim: multiple of 8 sized to hit target_bytes; full-extent
    # only when rows < 8.
    if rows >= 8:
        cand = max(8, (target_bytes // (l_blk * itemsize)) // 8 * 8)
        rows_aligned = rows if rows % 8 == 0 else (rows // 8) * 8
        r_blk = min(rows_aligned, cand)
    else:
        r_blk = rows
    return r_blk, l_blk


def biased_prelu(x_nchw, bias, alpha):
    """x_nchw: (N, C, H, W); bias, alpha: (C,). Returns same shape/dtype as x."""
    N, C, H, W = x_nchw.shape
    rows, hw = N * C, H * W

    x2d = x_nchw.reshape(rows, hw)
    # Per-row params (row r = n*C + c -> bias[c], alpha[c]); kept in float32
    # to stay faithful to f32 module parameters even for bf16 activations.
    bias_rows = jnp.tile(bias.astype(jnp.float32), N).reshape(rows, 1)
    alpha_rows = jnp.tile(alpha.astype(jnp.float32), N).reshape(rows, 1)

    vmem_limit, target_bytes = _vmem_budget_and_tile_target()
    itemsize = jnp.dtype(x2d.dtype).itemsize
    r_blk, l_blk = _choose_tiles(rows, hw, itemsize, target_bytes)
    grid = (pl.cdiv(rows, r_blk), pl.cdiv(hw, l_blk))  # lane axis innermost

    out2d = pl.pallas_call(
        _biased_prelu_kernel,
        out_shape=jax.ShapeDtypeStruct((rows, hw), x2d.dtype),
        grid_spec=pltpu.PrefetchScalarGridSpec(
            num_scalar_prefetch=0,
            grid=grid,
            in_specs=[
                pl.BlockSpec((r_blk, l_blk), lambda i, j: (i, j)),
                pl.BlockSpec((r_blk, 1), lambda i, j: (i, 0)),
                pl.BlockSpec((r_blk, 1), lambda i, j: (i, 0)),
            ],
            out_specs=pl.BlockSpec((r_blk, l_blk), lambda i, j: (i, j)),
        ),
        compiler_params=pltpu.CompilerParams(
            dimension_semantics=("parallel", "parallel"),
            vmem_limit_bytes=vmem_limit,
        ),
    )(x2d, bias_rows, alpha_rows)

    return out2d.reshape(N, C, H, W)


if __name__ == "__main__":
    key = jax.random.PRNGKey(0)
    kx, kb = jax.random.split(key)

    N, C, H, W = 2, 4, 16, 16
    x = jax.random.normal(kx, (N, C, H, W), dtype=jnp.float32)

    # Deterministic parameter init mirroring the module's __init__:
    #   bias ~ U(-0.1, 0.1) per channel, PReLU alpha initialized to 0.25.
    bias = jax.random.uniform(kb, (C,), minval=-0.1, maxval=0.1,
                              dtype=jnp.float32)
    alpha = jnp.full((C,), 0.25, dtype=jnp.float32)

    y = biased_prelu(x, bias, alpha)
    jax.block_until_ready(y)

    # Pure-JAX reference check.
    z_ref = x - bias.reshape(1, C, 1, 1)
    y_ref = jnp.where(z_ref >= 0, z_ref, alpha.reshape(1, C, 1, 1) * z_ref)
    assert jnp.allclose(y, y_ref, atol=1e-6), "mismatch vs reference"

    print("KERNEL_OK")
</pallas_src>

<mosaic_0001>
module attributes {stable_mosaic.version = 11 : i64} {
  func.func @_biased_prelu_kernel(%arg0: i32, %arg1: i32, %arg2: memref<8x256xf32, #tpu.memory_space<vmem>>, %arg3: memref<8x1xf32, #tpu.memory_space<vmem>>, %arg4: memref<8x1xf32, #tpu.memory_space<vmem>>, %arg5: memref<8x256xf32, #tpu.memory_space<vmem>>) attributes {dimension_semantics = [#tpu.dimension_semantics<parallel>, #tpu.dimension_semantics<parallel>], iteration_bounds = array<i64: 1, 1>, scalar_prefetch = 0 : i64, scratch_operands = 0 : i64, tpu.core_type = #tpu.core_type<tc>, window_params = [{transform_indices = @transform_0, window_bounds = array<i64: 8, 256>}, {transform_indices = @transform_1, window_bounds = array<i64: 8, 1>}, {transform_indices = @transform_2, window_bounds = array<i64: 8, 1>}, {transform_indices = @transform_3, window_bounds = array<i64: 8, 256>}]} {
    %c0 = arith.constant 0 : index
    %c0_0 = arith.constant 0 : index
    %0 = vector.load %arg2[%c0, %c0_0] : memref<8x256xf32, #tpu.memory_space<vmem>>, vector<8x256xf32>
    %c0_1 = arith.constant 0 : index
    %c0_2 = arith.constant 0 : index
    %1 = vector.load %arg3[%c0_1, %c0_2] : memref<8x1xf32, #tpu.memory_space<vmem>>, vector<8x1xf32>
    %c0_3 = arith.constant 0 : index
    %c0_4 = arith.constant 0 : index
    %2 = vector.load %arg4[%c0_3, %c0_4] : memref<8x1xf32, #tpu.memory_space<vmem>>, vector<8x1xf32>
    %3 = vector.broadcast %1 : vector<8x1xf32> to vector<8x256xf32>
    %4 = arith.subf %0, %3 : vector<8x256xf32>
    %cst = arith.constant 0.000000e+00 : f32
    %5 = vector.broadcast %cst : f32 to vector<8x256xf32>
    %6 = arith.cmpf oge, %4, %5 : vector<8x256xf32>
    %7 = vector.broadcast %2 : vector<8x1xf32> to vector<8x256xf32>
    %8 = arith.mulf %7, %4 : vector<8x256xf32>
    %9 = arith.select %6, %4, %8 : vector<8x256xi1>, vector<8x256xf32>
    %c0_5 = arith.constant 0 : index
    %c0_6 = arith.constant 0 : index
    %10 = vector.load %arg5[%c0_5, %c0_6] : memref<8x256xf32, #tpu.memory_space<vmem>>, vector<8x256xf32>
    tpu.vector_store %arg5[%c0_5, %c0_6], %9 {strides = array<i32>} : memref<8x256xf32, #tpu.memory_space<vmem>>, vector<8x256xf32>,
    return
  }
  func.func @transform_0(%arg0: i32, %arg1: i32) -> (i32, i32) {
    %c0_i32 = arith.constant 0 : i32
    return %arg0, %arg1 : i32, i32
  }
  func.func @transform_1(%arg0: i32, %arg1: i32) -> (i32, i32) {
    %c0_i32 = arith.constant 0 : i32
    %c0_i32_0 = arith.constant 0 : i32
    return %arg0, %c0_i32 : i32, i32
  }
  func.func @transform_2(%arg0: i32, %arg1: i32) -> (i32, i32) {
    %c0_i32 = arith.constant 0 : i32
    %c0_i32_0 = arith.constant 0 : i32
    return %arg0, %c0_i32 : i32, i32
  }
  func.func @transform_3(%arg0: i32, %arg1: i32) -> (i32, i32) {
    %c0_i32 = arith.constant 0 : i32
    return %arg0, %arg1 : i32, i32
  }
}

</mosaic_0001>

<llo_original>
// kernel: tpu_custom_call.1
$region0: #{tpu_custom_call.1}
  #allocation0 [shape = 'u32[]', space=smem, size = 0x4, offset = 0x4, fixed_abs, tag = 'smem constant byte address 0x4 - core index']
  #allocation1 [shape = 'u32[144,128]{1,0:T(1,128)}', space=vmem, size = 0x12000, scoped, tag = 'internal scratch']
  %s0 = inlined_call_operand.vmem [shape: f32[8,256], index: 0, kind: input, shape index: {}]
  %s1 = inlined_call_operand.vmem [shape: f32[8,1], index: 1, kind: input, shape index: {}]
  %s2 = inlined_call_operand.vmem [shape: f32[8,1], index: 2, kind: input, shape index: {}]
  %s3 = inlined_call_operand.hbm [shape: f32[8,256], index: 3, kind: output, shape index: {}]
  %s4 = sld [smem:[#allocation0]]
  $region22: #{tpu_custom_call.1} parent=0
    _
  %s6 = ssub.s32 1, %s4
  %s7 = scalar_select 0, %s6, %s4
  $region1: #{tpu_custom_call.1} parent=0
    #allocation2 [shape = 'u8[8192]{0}', space=vmem, size = 0x2000, scoped, tag = 'output window, operand 0, single buffered']
    #allocation3 [shape = 's32[1]{0}', space=sflag, size = 0x4, scoped, tag = 'scoped memory for tpu_custom_call.1']
    %8 = vsyncpa [#allocation3], 0
    // Predicated region
    $region2: #{tpu_custom_call.1} parent=1 // pred_check
      _
    $region3: #{tpu_custom_call.1} parent=1 // pred_check_branch
      %10 = sbr.rel (0) target = $region5
    $region4: #{tpu_custom_call.1} parent=1 // pred_region
      _
    $region5: #{tpu_custom_call.1} parent=1 // pred_fallthru
      _
    // Predicated region
    $region6: #{tpu_custom_call.1} parent=1 // pred_check
      _
    $region7: #{tpu_custom_call.1} parent=1 // pred_check_branch
      %12 = sbr.rel (0) target = $region9
    $region8: #{tpu_custom_call.1} parent=1 // pred_region
      _
    $region9: #{tpu_custom_call.1} parent=1 // pred_fallthru
      _
    // Predicated region
    $region10: #{tpu_custom_call.1} parent=1 // pred_check
      _
    $region11: #{tpu_custom_call.1} parent=1 // pred_check_branch
      %14 = sbr.rel (0) target = $region13
    $region12: #{tpu_custom_call.1} parent=1 // pred_region
      _
    $region13: #{tpu_custom_call.1} parent=1 // pred_fallthru
      _
    %v15 = vld [vmem:[%s0] sm:$0xff]
    %v16 = vld [vmem:[%s0 + $0x8] sm:$0xff]
    %v17 = vld [vmem:[%s1] sm:$0xff]
    %v18 = vld [vmem:[%s2] sm:$0xff]
    %20 = vset.pattern.permute.xlu0 0
    %21 = vperm.xlu0 %20, %v17
    %v22 = vpop.permute.xlu0 %21
    %v24 = vsub.f32 %v15, %v22
    %v25 = vsub.f32 %v16, %v22
    %vm26 = vcmp.ge.f32.partialorder %v24, 0.0
    %vm27 = vcmp.ge.f32.partialorder %v25, 0.0
    %29 = vset.pattern.permute.xlu0 0
    %30 = vperm.xlu0 %29, %v18
    %v31 = vpop.permute.xlu0 %30
    %v33 = vmul.f32 %v31, %v24
    %v34 = vmul.f32 %v31, %v25
    %v35 = vsel %vm26, %v24, %v33
    %v36 = vsel %vm27, %v25, %v34
    %37 = vst [vmem:[#allocation2] sm:$0xff] %v35
    %38 = vst [vmem:[#allocation2 + $0x8] sm:$0xff] %v36
    // Predicated region
    $region14: #{tpu_custom_call.1} parent=1 // pred_check
      _
    $region15: #{tpu_custom_call.1} parent=1 // pred_check_branch
      %40 = sbr.rel (0) target = $region17
    $region16: #{tpu_custom_call.1} parent=1 // pred_region
      %s42 = ssub.s32 256, 256
      %43 = vsyncadd [#allocation3], %s42
      %s45 = sshll.u32 [#allocation2], 4
      %s46 = int_to_ptr.vmem [resolvable:$true] %s45
      %48 = dma.vmem_to_hbm [thread:$0]  %s46, 256, %s3, [#allocation3]
    $region17: #{tpu_custom_call.1} parent=1 // pred_fallthru
      _
    // Predicated region
    $region18: #{tpu_custom_call.1} parent=1 // pred_check
      _
    $region19: #{tpu_custom_call.1} parent=1 // pred_check_branch
      %50 = sbr.rel (0) target = $region21
    $region20: #{tpu_custom_call.1} parent=1 // pred_region
      %51 = dma.done [#allocation3], 256
    $region21: #{tpu_custom_call.1} parent=1 // pred_fallthru
      _
    %52 = vsyncpa [#allocation3], 1

</llo_original>
